<compile_context>
chip_gen: v5e
topology: v5e:2x2
jax: 0.10.0
libtpu: 0.0.40
codegen_flags: <defaults>
</compile_context>

<pallas_src>
import jax
import jax.numpy as jnp
from jax.experimental import pallas as pl
from jax.experimental.pallas import tpu as pltpu


def policy_net_kernel(xT_ref, w1_ref, b1_ref, w2_ref, b2_ref, outT_ref):
    # fc1: h = W1 @ x^T + b1, ReLU                    -> (hidden_dim, TILE_B), f32
    h = jnp.dot(w1_ref[...], xT_ref[...], preferred_element_type=jnp.float32)
    h = jnp.maximum(h + b1_ref[...], 0.0)

    # fc2: logits = W2 @ h + b2                       -> (action_dim, TILE_B), f32
    logits = jnp.dot(w2_ref[...], h.astype(w2_ref.dtype),
                     preferred_element_type=jnp.float32) + b2_ref[...]

    # softmax over the action axis (sublane axis in this layout)
    m = jnp.max(logits, axis=0, keepdims=True)
    e = jnp.exp(logits - m)
    s = jnp.sum(e, axis=0, keepdims=True)
    outT_ref[...] = (e * pl.reciprocal(s, approx=True)).astype(outT_ref.dtype)


def policy_net_forward(x, w1, b1, w2, b2, *, tile_b=2048, matmul_dtype=jnp.bfloat16):
    """softmax(relu(x @ W1^T + b1) @ W2^T + b2, axis=1) with torch-layout weights.

    x: (batch, state_dim); w1: (hidden, state); b1: (hidden,);
    w2: (action, hidden);  b2: (action,).  Returns (batch, action_dim) float32.
    """
    batch, state_dim = x.shape
    hidden_dim = w1.shape[0]
    action_dim = w2.shape[0]

    # Batch tile lives on the lane axis: multiple of 128, capped by tile_b.
    # tile_b default (2048) keeps double-buffered x/out tiles well under the
    # scoped-VMEM limits of v5e (16 MiB) and v7x (32 MiB).
    padded_min = ((batch + 127) // 128) * 128
    tb = min(tile_b, padded_min)
    padded = ((batch + tb - 1) // tb) * tb
    grid = (padded // tb,)

    # Feature-major (transposed) input so batch is lane-dense; bf16 matmul operands.
    xT = jnp.transpose(x).astype(matmul_dtype)                    # (state_dim, batch)
    if padded != batch:
        xT = jnp.pad(xT, ((0, 0), (0, padded - batch)))
    w1c = w1.astype(matmul_dtype)                                 # (hidden, state)
    w2c = w2.astype(matmul_dtype)                                 # (action, hidden)
    b1c = b1.reshape(hidden_dim, 1).astype(jnp.float32)
    b2c = b2.reshape(action_dim, 1).astype(jnp.float32)

    outT = pl.pallas_call(
        policy_net_kernel,
        out_shape=jax.ShapeDtypeStruct((action_dim, padded), jnp.float32),
        grid=grid,
        in_specs=[
            pl.BlockSpec((state_dim, tb), lambda i: (0, i)),          # streams per tile
            pl.BlockSpec((hidden_dim, state_dim), lambda i: (0, 0)),  # resident
            pl.BlockSpec((hidden_dim, 1), lambda i: (0, 0)),          # resident
            pl.BlockSpec((action_dim, hidden_dim), lambda i: (0, 0)), # resident
            pl.BlockSpec((action_dim, 1), lambda i: (0, 0)),          # resident
        ],
        out_specs=pl.BlockSpec((action_dim, tb), lambda i: (0, i)),
        compiler_params=pltpu.CompilerParams(
            dimension_semantics=("parallel",),   # batch tiles are independent (2 TCs on v7x)
        ),
    )(xT, w1c, b1c, w2c, b2c)

    return jnp.transpose(outT[:, :batch])                          # (batch, action_dim)


def init_params(key, state_dim, hidden_dim, action_dim):
    # torch.nn.Linear-style uniform(-1/sqrt(fan_in), 1/sqrt(fan_in)), torch layout.
    k1, k2, k3, k4 = jax.random.split(key, 4)
    bound1 = 1.0 / jnp.sqrt(state_dim)
    bound2 = 1.0 / jnp.sqrt(hidden_dim)
    w1 = jax.random.uniform(k1, (hidden_dim, state_dim), jnp.float32, -bound1, bound1)
    b1 = jax.random.uniform(k2, (hidden_dim,), jnp.float32, -bound1, bound1)
    w2 = jax.random.uniform(k3, (action_dim, hidden_dim), jnp.float32, -bound2, bound2)
    b2 = jax.random.uniform(k4, (action_dim,), jnp.float32, -bound2, bound2)
    return w1, b1, w2, b2


def reference(x, w1, b1, w2, b2):
    # Pure-JAX reference mirroring the kernel's bf16 matmul operands (f32 accumulation).
    f32 = jnp.float32
    xb = x.astype(jnp.bfloat16).astype(f32)
    w1b = w1.astype(jnp.bfloat16).astype(f32)
    w2b = w2.astype(jnp.bfloat16).astype(f32)
    h = jnp.maximum(xb @ w1b.T + b1, 0.0)
    hb = h.astype(jnp.bfloat16).astype(f32)
    return jax.nn.softmax(hb @ w2b.T + b2, axis=1)


if __name__ == "__main__":
    state_dim, hidden_dim, action_dim = 16, 32, 4

    key = jax.random.PRNGKey(0)
    kx, kp, kx2 = jax.random.split(key, 3)
    w1, b1, w2, b2 = init_params(kp, state_dim, hidden_dim, action_dim)

    # Case 1: tiny batch (single grid step, padded to one 128-wide tile).
    batch = 8
    x = jax.random.normal(kx, (batch, state_dim), jnp.float32)
    out = policy_net_forward(x, w1, b1, w2, b2)
    jax.block_until_ready(out)
    ref = reference(x, w1, b1, w2, b2)
    assert out.shape == (batch, action_dim)
    assert jnp.allclose(out, ref, atol=2e-3, rtol=2e-3)
    assert jnp.allclose(jnp.sum(out, axis=1), 1.0, atol=5e-3)

    # Case 2: multi-tile grid (exercises the batch grid / pipelining path).
    batch2 = 384
    x2 = jax.random.normal(kx2, (batch2, state_dim), jnp.float32)
    out2 = policy_net_forward(x2, w1, b1, w2, b2, tile_b=128)
    jax.block_until_ready(out2)
    ref2 = reference(x2, w1, b1, w2, b2)
    assert out2.shape == (batch2, action_dim)
    assert jnp.allclose(out2, ref2, atol=2e-3, rtol=2e-3)
    assert jnp.allclose(jnp.sum(out2, axis=1), 1.0, atol=5e-3)

    print("KERNEL_OK")
</pallas_src>

<mosaic_0001>
module attributes {stable_mosaic.version = 11 : i64} {
  func.func @policy_net_kernel(%arg0: i32, %arg1: memref<16x128xbf16, #tpu.memory_space<vmem>>, %arg2: memref<32x16xbf16, #tpu.memory_space<vmem>>, %arg3: memref<32x1xf32, #tpu.memory_space<vmem>>, %arg4: memref<4x32xbf16, #tpu.memory_space<vmem>>, %arg5: memref<4x1xf32, #tpu.memory_space<vmem>>, %arg6: memref<4x128xf32, #tpu.memory_space<vmem>>) attributes {dimension_semantics = [#tpu.dimension_semantics<parallel>], iteration_bounds = array<i64: 1>, scalar_prefetch = 0 : i64, scratch_operands = 0 : i64, tpu.core_type = #tpu.core_type<tc>, window_params = [{transform_indices = @transform_0, window_bounds = array<i64: 16, 128>}, {pipeline_mode = #tpu.pipeline_mode<synchronous>, transform_indices = @transform_1, window_bounds = array<i64: 32, 16>}, {pipeline_mode = #tpu.pipeline_mode<synchronous>, transform_indices = @transform_2, window_bounds = array<i64: 32, 1>}, {pipeline_mode = #tpu.pipeline_mode<synchronous>, transform_indices = @transform_3, window_bounds = array<i64: 4, 32>}, {pipeline_mode = #tpu.pipeline_mode<synchronous>, transform_indices = @transform_4, window_bounds = array<i64: 4, 1>}, {transform_indices = @transform_5, window_bounds = array<i64: 4, 128>}]} {
    %c0 = arith.constant 0 : index
    %c0_0 = arith.constant 0 : index
    %0 = vector.load %arg2[%c0, %c0_0] : memref<32x16xbf16, #tpu.memory_space<vmem>>, vector<32x16xbf16>
    %c0_1 = arith.constant 0 : index
    %c0_2 = arith.constant 0 : index
    %1 = vector.load %arg1[%c0_1, %c0_2] : memref<16x128xbf16, #tpu.memory_space<vmem>>, vector<16x128xbf16>
    %cst = arith.constant dense<0.000000e+00> : vector<32x128xf32>
    %2 = tpu.matmul %0, %1, %cst {dimension_numbers = #tpu.dot_dimension_numbers<[1], [0], [0], [1], [0, 0, 1, 1], [], []>} : vector<32x16xbf16>, vector<16x128xbf16>, vector<32x128xf32> -> vector<32x128xf32>
    %c0_3 = arith.constant 0 : index
    %c0_4 = arith.constant 0 : index
    %3 = vector.load %arg3[%c0_3, %c0_4] : memref<32x1xf32, #tpu.memory_space<vmem>>, vector<32x1xf32>
    %4 = vector.broadcast %3 : vector<32x1xf32> to vector<32x128xf32>
    %5 = arith.addf %2, %4 : vector<32x128xf32>
    %cst_5 = arith.constant 0.000000e+00 : f32
    %6 = vector.broadcast %cst_5 : f32 to vector<32x128xf32>
    %7 = arith.maximumf %5, %6 : vector<32x128xf32>
    %c0_6 = arith.constant 0 : index
    %c0_7 = arith.constant 0 : index
    %8 = vector.load %arg4[%c0_6, %c0_7] : memref<4x32xbf16, #tpu.memory_space<vmem>>, vector<4x32xbf16>
    %9 = arith.truncf %7 : vector<32x128xf32> to vector<32x128xbf16>
    %cst_8 = arith.constant dense<0.000000e+00> : vector<4x128xf32>
    %10 = tpu.matmul %8, %9, %cst_8 {dimension_numbers = #tpu.dot_dimension_numbers<[1], [0], [0], [1], [0, 0, 1, 1], [], []>} : vector<4x32xbf16>, vector<32x128xbf16>, vector<4x128xf32> -> vector<4x128xf32>
    %c0_9 = arith.constant 0 : index
    %c0_10 = arith.constant 0 : index
    %11 = vector.load %arg5[%c0_9, %c0_10] : memref<4x1xf32, #tpu.memory_space<vmem>>, vector<4x1xf32>
    %12 = vector.broadcast %11 : vector<4x1xf32> to vector<4x128xf32>
    %13 = arith.addf %10, %12 : vector<4x128xf32>
    %cst_11 = arith.constant dense<0xFF800000> : vector<128xf32>
    %14 = vector.multi_reduction <maximumf>, %13, %cst_11 [0] : vector<4x128xf32> to vector<128xf32>
    %15 = vector.shape_cast %14 : vector<128xf32> to vector<1x128xf32>
    %16 = vector.broadcast %15 : vector<1x128xf32> to vector<4x128xf32>
    %17 = arith.subf %13, %16 : vector<4x128xf32>
    %18 = math.exp %17 : vector<4x128xf32>
    %cst_12 = arith.constant dense<0.000000e+00> : vector<128xf32>
    %19 = vector.multi_reduction <add>, %18, %cst_12 [0] : vector<4x128xf32> to vector<128xf32>
    %20 = vector.shape_cast %19 : vector<128xf32> to vector<1x128xf32>
    %21 = tpu.reciprocal %20 {approx = true} : vector<1x128xf32> -> vector<1x128xf32>
    %22 = vector.broadcast %21 : vector<1x128xf32> to vector<4x128xf32>
    %23 = arith.mulf %18, %22 : vector<4x128xf32>
    %c0_13 = arith.constant 0 : index
    %c0_14 = arith.constant 0 : index
    %24 = vector.load %arg6[%c0_13, %c0_14] : memref<4x128xf32, #tpu.memory_space<vmem>>, vector<4x128xf32>
    tpu.vector_store %arg6[%c0_13, %c0_14], %23 {strides = array<i32>} : memref<4x128xf32, #tpu.memory_space<vmem>>, vector<4x128xf32>,
    return
  }
  func.func @transform_0(%arg0: i32) -> (i32, i32) {
    %c0_i32 = arith.constant 0 : i32
    %c0_i32_0 = arith.constant 0 : i32
    return %c0_i32, %arg0 : i32, i32
  }
  func.func @transform_1(%arg0: i32) -> (i32, i32) {
    %c0_i32 = arith.constant 0 : i32
    %c0_i32_0 = arith.constant 0 : i32
    %c0_i32_1 = arith.constant 0 : i32
    return %c0_i32, %c0_i32_0 : i32, i32
  }
  func.func @transform_2(%arg0: i32) -> (i32, i32) {
    %c0_i32 = arith.constant 0 : i32
    %c0_i32_0 = arith.constant 0 : i32
    %c0_i32_1 = arith.constant 0 : i32
    return %c0_i32, %c0_i32_0 : i32, i32
  }
  func.func @transform_3(%arg0: i32) -> (i32, i32) {
    %c0_i32 = arith.constant 0 : i32
    %c0_i32_0 = arith.constant 0 : i32
    %c0_i32_1 = arith.constant 0 : i32
    return %c0_i32, %c0_i32_0 : i32, i32
  }
  func.func @transform_4(%arg0: i32) -> (i32, i32) {
    %c0_i32 = arith.constant 0 : i32
    %c0_i32_0 = arith.constant 0 : i32
    %c0_i32_1 = arith.constant 0 : i32
    return %c0_i32, %c0_i32_0 : i32, i32
  }
  func.func @transform_5(%arg0: i32) -> (i32, i32) {
    %c0_i32 = arith.constant 0 : i32
    %c0_i32_0 = arith.constant 0 : i32
    return %c0_i32, %arg0 : i32, i32
  }
}

</mosaic_0001>

<llo_original>
// kernel: tpu_custom_call.1
$region0: #{tpu_custom_call.1}
  #allocation0 [shape = 'u32[]', space=smem, size = 0x4, offset = 0x4, fixed_abs, tag = 'smem constant byte address 0x4 - core index']
  #allocation1 [shape = 'u32[72,128]{1,0:T(1,128)}', space=vmem, size = 0x9000, scoped, tag = 'internal scratch']
  %s0 = inlined_call_operand.vmem [shape: bf16[16,128], index: 0, kind: input, shape index: {}]
  %s1 = inlined_call_operand.vmem [shape: bf16[32,16], index: 1, kind: input, shape index: {}]
  %s2 = inlined_call_operand.vmem [shape: f32[32,1], index: 2, kind: input, shape index: {}]
  %s3 = inlined_call_operand.vmem [shape: bf16[4,32], index: 3, kind: input, shape index: {}]
  %s4 = inlined_call_operand.vmem [shape: f32[4,1], index: 4, kind: input, shape index: {}]
  %s5 = inlined_call_operand.hbm [shape: f32[4,128], index: 5, kind: output, shape index: {}]
  %s6 = sld [smem:[#allocation0]]
  $region30: #{tpu_custom_call.1} parent=0
    _
  %s8 = ssub.s32 1, %s6
  %s9 = scalar_select 0, %s8, %s6
  $region1: #{tpu_custom_call.1} parent=0
    #allocation2 [shape = 'u8[2048]{0}', space=vmem, size = 0x800, scoped, tag = 'output window, operand 0, single buffered']
    #allocation3 [shape = 's32[1]{0}', space=sflag, size = 0x4, scoped, tag = 'scoped memory for tpu_custom_call.1']
    %10 = vsyncpa [#allocation3], 0
    // Predicated region
    $region2: #{tpu_custom_call.1} parent=1 // pred_check
      _
    $region3: #{tpu_custom_call.1} parent=1 // pred_check_branch
      %12 = sbr.rel (0) target = $region5
    $region4: #{tpu_custom_call.1} parent=1 // pred_region
      _
    $region5: #{tpu_custom_call.1} parent=1 // pred_fallthru
      _
    // Predicated region
    $region6: #{tpu_custom_call.1} parent=1 // pred_check
      _
    $region7: #{tpu_custom_call.1} parent=1 // pred_check_branch
      %14 = sbr.rel (0) target = $region9
    $region8: #{tpu_custom_call.1} parent=1 // pred_region
      _
    $region9: #{tpu_custom_call.1} parent=1 // pred_fallthru
      _
    // Predicated region
    $region10: #{tpu_custom_call.1} parent=1 // pred_check
      _
    $region11: #{tpu_custom_call.1} parent=1 // pred_check_branch
      %16 = sbr.rel (0) target = $region13
    $region12: #{tpu_custom_call.1} parent=1 // pred_region
      _
    $region13: #{tpu_custom_call.1} parent=1 // pred_fallthru
      _
    // Predicated region
    $region14: #{tpu_custom_call.1} parent=1 // pred_check
      _
    $region15: #{tpu_custom_call.1} parent=1 // pred_check_branch
      %18 = sbr.rel (0) target = $region17
    $region16: #{tpu_custom_call.1} parent=1 // pred_region
      _
    $region17: #{tpu_custom_call.1} parent=1 // pred_fallthru
      _
    // Predicated region
    $region18: #{tpu_custom_call.1} parent=1 // pred_check
      _
    $region19: #{tpu_custom_call.1} parent=1 // pred_check_branch
      %20 = sbr.rel (0) target = $region21
    $region20: #{tpu_custom_call.1} parent=1 // pred_region
      _
    $region21: #{tpu_custom_call.1} parent=1 // pred_fallthru
      _
    %v22 = vld [vmem:[%s1] sm:$0xf]
    %v23 = vld [vmem:[%s1 + $0x4] sm:$0xf]
    %v24 = vld [vmem:[%s1 + $0x8] sm:$0xf]
    %v25 = vld [vmem:[%s1 + $0xc] sm:$0xf]
    %v26 = vld [vmem:[%s0] sm:$0xf]
    %v27 = vld [vmem:[%s0 + $0x4] sm:$0xf]
    %v28 = vld [vmem:[%s2] sm:$0xff]
    %v29 = vld [vmem:[%s2 + $0x8] sm:$0xff]
    %v30 = vld [vmem:[%s2 + $0x10] sm:$0xff]
    %v31 = vld [vmem:[%s2 + $0x18] sm:$0xff]
    %33 = vset.pattern.permute.xlu0 0
    %34 = vperm.xlu0 %33, %v28
    %v35 = vpop.permute.xlu0 %34
    %38 = vset.pattern.permute.xlu0 0
    %39 = vperm.xlu0 %38, %v29
    %v40 = vpop.permute.xlu0 %39
    %43 = vset.pattern.permute.xlu0 0
    %44 = vperm.xlu0 %43, %v30
    %v45 = vpop.permute.xlu0 %44
    %48 = vset.pattern.permute.xlu0 0
    %49 = vperm.xlu0 %48, %v31
    %v50 = vpop.permute.xlu0 %49
    %v56 = vunpack.c.l.b16 %v22
    %v57 = vunpack.c.l.b16 %v23
    %v58 = vunpack.c.l.b16 %v24
    %v59 = vunpack.c.l.b16 %v25
    %v60 = vpack.c.b16 %v57, %v56
    %v61 = vpack.c.b16 %v59, %v58
    %v64 = vunpack.c.l.b16 %v26
    %v65 = vunpack.c.l.b16 %v27
    %v66 = vpack.c.b16 %v65, %v64
    %vm68 = vcmask 130048
    %v70 = vsel %vm68, %v60, 0
    %v73 = vsel %vm68, %v61, 0
    %75 = vmatpush.bf16.msra.mxu0 0
    %76 = vmatpush.bf16.msra.mxu0 0
    %77 = vmatpush.bf16.msra.mxu0 0
    %78 = vmatpush.bf16.msra.mxu0 0
    %79 = vmatpush.bf16.msra.mxu0 0
    %80 = vmatpush.bf16.msra.mxu0 0
    %81 = vmatpush.bf16.msra.mxu0 0
    %82 = vmatpush.bf16.msra.mxu0 %v66
    %83 = vmatmul.bf16.gmra.mxu0 %v70
    %v84 = vpop.f32.mrf.mxu0
    %v85 = vadd.f32 %v35, %v84
    %v86 = vpop.f32.mrf.mxu0
    %v87 = vadd.f32 %v40, %v86
    %88 = vmatmul.bf16.gmra.mxu0 %v73
    %v89 = vpop.f32.mrf.mxu0
    %v90 = vadd.f32 %v45, %v89
    %v91 = vpop.f32.mrf.mxu0
    %v92 = vadd.f32 %v50, %v91
    %93 = vdwg.mxu0
    %v94 = vmax.f32 %v85, 0.0
    %v95 = vmax.f32 %v87, 0.0
    %v96 = vmax.f32 %v90, 0.0
    %v97 = vmax.f32 %v92, 0.0
    %v98 = vld [vmem:[%s3] sm:$0x3]
    %v99 = vpack.c.bf16 %v95, %v94
    %v100 = vpack.c.bf16 %v97, %v96
    %v101 = vld [vmem:[%s4] sm:$0xf]
    %103 = vset.pattern.permute.xlu0 0
    %104 = vperm.xlu0 %103, %v101
    %v105 = vpop.permute.xlu0 %104
    %vm107 = vcmask 261120
    %v109 = vsel %vm107, %v98, 0
    %111 = vmatpush.bf16.msra.mxu0 0
    %112 = vmatpush.bf16.msra.mxu0 0
    %113 = vmatpush.bf16.msra.mxu0 0
    %114 = vmatpush.bf16.msra.mxu0 0
    %115 = vmatpush.bf16.msra.mxu0 0
    %116 = vmatpush.bf16.msra.mxu0 0
    %117 = vmatpush.bf16.msra.mxu0 %v100
    %118 = vmatpush.bf16.msra.mxu0 %v99
    %119 = vmatmul.bf16.gmra.mxu0 %v109
    %v120 = vpop.f32.mrf.mxu0
    %v121 = vadd.f32 %v105, %v120
    %v122 = vpop.f32.mrf.mxu0
    %123 = vdwg.mxu0
    %vm124 = vcmask 1043456
    %v125 = vsel %vm124, %v121, -inf
    %v126 = vrot.slane %v125, 4
    %v127 = vmax.f32 %v125, %v126
    %v128 = vrot.slane %v127, 2
    %v129 = vmax.f32 %v127, %v128
    %v130 = vrot.slane %v129, 1
    %v131 = vmax.f32 %v129, %v130
    %v132 = vsub.f32 %v121, %v131
    %v133 = vmul.f32 %v132, 1.442695
    %v134 = vpow.pop %v133
    %v135 = vsel %vm124, %v134, 0.0
    %v136 = vrot.slane %v135, 4
    %v137 = vadd.f32 %v135, %v136
    %v138 = vrot.slane %v137, 2
    %v139 = vadd.f32 %v137, %v138
    %v140 = vrot.slane %v139, 1
    %v141 = vadd.f32 %v139, %v140
    %v142 = vrcp.pop %v141
    %v143 = vmul.f32 %v134, %v142
    %144 = vst [vmem:[#allocation2] sm:$0xf] %v143
    // Predicated region
    $region22: #{tpu_custom_call.1} parent=1 // pred_check
      _
    $region23: #{tpu_custom_call.1} parent=1 // pred_check_branch
      %146 = sbr.rel (0) target = $region25
    $region24: #{tpu_custom_call.1} parent=1 // pred_region
      %148 = vsyncadd [#allocation3], 0
      %s150 = sshll.u32 [#allocation2], 4
      %s151 = int_to_ptr.vmem [resolvable:$true] %s150
      %s152 = sshll.u32 %s5, 4
      %s153 = int_to_ptr.hbm [resolvable:$true] %s152
      %155 = dma.vmem_to_hbm [thread:$0]  %s151, 64, %s153, [#allocation3]
    $region25: #{tpu_custom_call.1} parent=1 // pred_fallthru
      _
    // Predicated region
    $region26: #{tpu_custom_call.1} parent=1 // pred_check
      _
    $region27: #{tpu_custom_call.1} parent=1 // pred_check_branch
      %157 = sbr.rel (0) target = $region29
    $region28: #{tpu_custom_call.1} parent=1 // pred_region
      %159 = dma.done [#allocation3], 64
    $region29: #{tpu_custom_call.1} parent=1 // pred_fallthru
      _
    %160 = vsyncpa [#allocation3], 1

</llo_original>
